<compile_context>
chip_gen: v7x
topology: tpu7x:2x2x1
jax: 0.10.0
libtpu: 0.0.40
codegen_flags: <defaults>
</compile_context>

<pallas_src>
from functools import partial
from math import sqrt

import jax
import jax.numpy as jnp
from jax.experimental import pallas as pl
from jax.experimental.pallas import tpu as pltpu


def _round_up(a, b):
    return (a + b - 1) // b * b


def _pick_tile(total, preferred):
    for t in preferred:
        if t <= total and total % t == 0:
            return t
    return total


def _vmem_capacity_bytes():
    try:
        cap = getattr(pltpu.get_tpu_info(), "vmem_capacity_bytes", None)
        if cap:
            return int(cap)
    except Exception:
        pass
    return 64 * 1024 * 1024  # conservative default: v7x per-TensorCore VMEM


# ----------------------------------------------------------------------------
# Kernel 1: fused, lane-dense QKV projection (q pre-scaled by 1/sqrt(head_dim))
# ----------------------------------------------------------------------------
def _qkv_proj_kernel(x_ref, w_ref, b_ref, q_ref, k_ref, v_ref, *, dp, scale):
    x = x_ref[0]                                   # (t, E)   compute dtype (bf16)
    w = w_ref[...]                                 # (E, 3Dp) compute dtype (bf16)
    # bf16 MXU inputs, f32 accumulation; f32 bias added to the f32 accumulator.
    qkv = jnp.dot(x, w, preferred_element_type=jnp.float32) + b_ref[...]
    q_ref[0] = (qkv[:, :dp] * scale).astype(q_ref.dtype)   # fold 1/sqrt(D) into q
    k_ref[0] = qkv[:, dp:2 * dp].astype(k_ref.dtype)
    v_ref[0] = qkv[:, 2 * dp:3 * dp].astype(v_ref.dtype)


# ----------------------------------------------------------------------------
# Kernel 2: flash attention with online softmax (KV streamed over the grid)
# ----------------------------------------------------------------------------
def _flash_attn_kernel(q_ref, k_ref, v_ref, o_ref, m_sc, l_sc, acc_sc, *,
                       tk, s_actual, s_padded):
    ki = pl.program_id(2)

    @pl.when(ki == 0)
    def _init():
        m_sc[...] = jnp.full(m_sc.shape, -jnp.inf, jnp.float32)
        l_sc[...] = jnp.zeros(l_sc.shape, jnp.float32)
        acc_sc[...] = jnp.zeros(acc_sc.shape, jnp.float32)

    q = q_ref[0]                                   # (tq, Dp), pre-scaled
    k = k_ref[0]                                   # (tk, Dp)
    v = v_ref[0]                                   # (tk, Dp)

    # scores: contract over the head dim directly (no k.T); bf16 MXU, f32 acc.
    s = jax.lax.dot_general(q, k,
                            dimension_numbers=(((1,), (1,)), ((), ())),
                            preferred_element_type=jnp.float32)   # (tq, tk)

    if s_padded != s_actual:  # static: only emitted when the sequence was padded
        # Only the last kv tile can contain padded keys; an additive (1, tk)
        # bias row costs ~1 VPU add per score element (vs iota+cmp+select).
        key_pos = ki * tk + jax.lax.broadcasted_iota(jnp.int32, (1, s.shape[-1]), 1)
        s = s + jnp.where(key_pos < s_actual, 0.0, -1e30)

    m_prev = m_sc[...]                             # (tq, 1)
    m_new = jnp.maximum(m_prev, jnp.max(s, axis=-1, keepdims=True))
    alpha = jnp.exp(m_prev - m_new)
    p = jnp.exp(s - m_new)
    l_sc[...] = alpha * l_sc[...] + jnp.sum(p, axis=-1, keepdims=True)
    acc_sc[...] = alpha * acc_sc[...] + jax.lax.dot_general(
        p.astype(v.dtype), v,                      # bf16 PV matmul, f32 acc
        dimension_numbers=(((1,), (0,)), ((), ())),
        preferred_element_type=jnp.float32)
    m_sc[...] = m_new

    @pl.when(ki == pl.num_programs(2) - 1)
    def _finalize():
        # Exact normalization (approx reciprocal was a flagged fidelity risk).
        o_ref[0] = (acc_sc[...] / l_sc[...]).astype(o_ref.dtype)


# ----------------------------------------------------------------------------
# Wrapper
# ----------------------------------------------------------------------------
def attention_head(x, wq, bq, wk, bk, wv, bv, *, q_tile=512, kv_tile=256,
                   compute_dtype=jnp.bfloat16, interpret=False):
    """x: [B, S, E]; w*: [E, D]; b*: [D] or [1, D] -> out [B, S, D]."""
    B, S, E = x.shape
    D = wq.shape[1]
    out_dtype = x.dtype
    scale = 1.0 / sqrt(D)

    bq = bq.reshape(1, D)
    bk = bk.reshape(1, D)
    bv = bv.reshape(1, D)

    # ---- pad head dim to a lane-dense multiple of 128 (zero pad is exact) ---
    Dp = _round_up(D, 128)
    # TODO(synk): for D << 128, pack several heads along the lane axis instead
    # of zero-padding one head (padding inflates MXU work & HBM bytes by Dp/D).
    pad_w = lambda w: jnp.pad(w, ((0, 0), (0, Dp - D)))
    pad_b = lambda b: jnp.pad(b, ((0, 0), (0, Dp - D)))
    # Cast x / fused weights to the compute dtype in the WRAPPER (halves their
    # HBM DMA and avoids a per-grid-step in-kernel cast).  Bias stays f32.
    w_all = jnp.concatenate([pad_w(wq), pad_w(wk), pad_w(wv)],
                            axis=1).astype(compute_dtype)          # (E, 3*Dp)
    b_all = jnp.concatenate([pad_b(bq), pad_b(bk), pad_b(bv)],
                            axis=1).astype(jnp.float32)            # (1, 3*Dp)

    # ---- sequence padding & decoupled q / kv tile sizes ----------------------
    Sp = _round_up(S, 128) if S > 128 else _round_up(S, 8)
    tq = min(q_tile, _pick_tile(Sp, (512, 448, 384, 320, 256, 192, 128)))
    tq = _pick_tile(Sp, (tq,)) if Sp % tq == 0 else _pick_tile(Sp, (256, 128))
    tk = min(kv_tile, _pick_tile(Sp, (256, 128)))
    tk = tk if Sp % tk == 0 else Sp

    # v7x: two TensorCores shard the "parallel" axes; expose >= 2 tiles of work.
    if B * (Sp // tq) < 2:
        half = _round_up(max(Sp // 2, 8), 8)
        if half < Sp and Sp % half == 0:
            tq = half

    # Full-sequence K/V blocks when one batch's K/V and a (tq, Sp) score tile
    # comfortably fit in VMEM: K/V are DMA'd once per batch, not once per q tile.
    cbytes = jnp.dtype(compute_dtype).itemsize
    if Sp * Dp * cbytes <= 2 * 1024 * 1024 and tq * Sp * 4 <= 8 * 1024 * 1024:
        tk = Sp

    if Sp != S:
        x = jnp.pad(x, ((0, 0), (0, Sp - S), (0, 0)))
    x = x.astype(compute_dtype)

    n_q, n_kv = Sp // tq, Sp // tk

    # ---- VMEM limit sized against the real per-core capacity (64 MiB on v7x) -
    vmem_limit = int(min(0.7 * _vmem_capacity_bytes(), 100 * 1024 * 1024))

    # ---- kernel 1: fused lane-dense QKV projection --------------------------
    def _run_proj(single_buffer_weights):
        kw = dict(pipeline_mode=pl.Buffered(1)) if single_buffer_weights else {}
        return pl.pallas_call(
            partial(_qkv_proj_kernel, dp=Dp, scale=scale),
            out_shape=[jax.ShapeDtypeStruct((B, Sp, Dp), compute_dtype)
                       for _ in range(3)],
            grid_spec=pltpu.PrefetchScalarGridSpec(
                num_scalar_prefetch=0,
                grid=(B, n_q),
                in_specs=[
                    pl.BlockSpec((1, tq, E), lambda b, si: (b, si, 0)),     # x
                    pl.BlockSpec((E, 3 * Dp), lambda b, si: (0, 0), **kw),  # [Wq|Wk|Wv]
                    pl.BlockSpec((1, 3 * Dp), lambda b, si: (0, 0), **kw),  # [bq|bk|bv]
                ],
                out_specs=[pl.BlockSpec((1, tq, Dp), lambda b, si: (b, si, 0))
                           for _ in range(3)],
            ),
            compiler_params=pltpu.CompilerParams(
                dimension_semantics=("parallel", "parallel"),
                vmem_limit_bytes=vmem_limit),
            interpret=interpret,
        )(x, w_all, b_all)

    try:
        # Grid-invariant weight/bias blocks single-buffered (halves their VMEM).
        q, k, v = _run_proj(True)
    except Exception:
        q, k, v = _run_proj(False)

    # ---- kernel 2: flash attention over (batch, q-tile, kv-tile) grid -------
    flash = pl.pallas_call(
        partial(_flash_attn_kernel, tk=tk, s_actual=S, s_padded=Sp),
        out_shape=jax.ShapeDtypeStruct((B, Sp, Dp), out_dtype),
        grid_spec=pltpu.PrefetchScalarGridSpec(
            num_scalar_prefetch=0,
            grid=(B, n_q, n_kv),
            in_specs=[
                pl.BlockSpec((1, tq, Dp), lambda b, qi, ki: (b, qi, 0)),   # q
                pl.BlockSpec((1, tk, Dp), lambda b, qi, ki: (b, ki, 0)),   # k
                pl.BlockSpec((1, tk, Dp), lambda b, qi, ki: (b, ki, 0)),   # v
            ],
            out_specs=pl.BlockSpec((1, tq, Dp), lambda b, qi, ki: (b, qi, 0)),
            scratch_shapes=[
                pltpu.VMEM((tq, 1), jnp.float32),    # running max
                pltpu.VMEM((tq, 1), jnp.float32),    # running denominator
                pltpu.VMEM((tq, Dp), jnp.float32),   # output accumulator
            ],
        ),
        compiler_params=pltpu.CompilerParams(
            dimension_semantics=("parallel", "parallel", "arbitrary"),
            vmem_limit_bytes=vmem_limit),
        interpret=interpret,
    )
    out = flash(q, k, v)

    # TODO(synk): fuse the QKV projection into the flash kernel (project the q
    # tile per qi and the K/V tile per ki) to remove the q/k/v HBM round trip.

    # strip head-dim / sequence padding (padded V columns are exactly zero)
    return out[:, :S, :D]


# ----------------------------------------------------------------------------
# Pure-JAX reference (mirrors the PyTorch module)
# ----------------------------------------------------------------------------
def reference(x, wq, bq, wk, bk, wv, bv):
    q = x @ wq + bq
    k = x @ wk + bk
    v = x @ wv + bv
    scores = jnp.einsum("bqd,bkd->bqk", q, k) / sqrt(q.shape[-1])
    w = jax.nn.softmax(scores, axis=-1)
    return jnp.einsum("bqk,bkd->bqd", w, v)


if __name__ == "__main__":
    B, S, E, D = 2, 8, 32, 16   # batch, seq, embed_dim, head_dim

    key = jax.random.PRNGKey(0)
    kx, kq, kbq, kk, kbk, kv_, kbv = jax.random.split(key, 7)

    x = jax.random.normal(kx, (B, S, E), dtype=jnp.float32)

    # deterministic "nn.Linear"-style parameters; weights stored as [E, D]
    bound = 1.0 / sqrt(E)
    wq = jax.random.uniform(kq, (E, D), minval=-bound, maxval=bound, dtype=jnp.float32)
    bq = jax.random.uniform(kbq, (1, D), minval=-bound, maxval=bound, dtype=jnp.float32)
    wk = jax.random.uniform(kk, (E, D), minval=-bound, maxval=bound, dtype=jnp.float32)
    bk = jax.random.uniform(kbk, (1, D), minval=-bound, maxval=bound, dtype=jnp.float32)
    wv = jax.random.uniform(kv_, (E, D), minval=-bound, maxval=bound, dtype=jnp.float32)
    bv = jax.random.uniform(kbv, (1, D), minval=-bound, maxval=bound, dtype=jnp.float32)

    ref = reference(x, wq, bq, wk, bk, wv, bv)

    # Default path: bf16 MXU inputs with f32 accumulation (perf-review default).
    out_bf16 = jax.block_until_ready(attention_head(x, wq, bq, wk, bk, wv, bv))
    assert out_bf16.shape == (B, S, D)
    err_bf16 = float(jnp.max(jnp.abs(out_bf16 - ref)))
    assert jnp.allclose(out_bf16, ref, atol=2e-2, rtol=2e-2), (
        f"bf16 kernel mismatch vs reference (max abs err {err_bf16:.3e})")

    # f32 path for tighter fidelity with the PyTorch module's numerics.
    out_f32 = jax.block_until_ready(
        attention_head(x, wq, bq, wk, bk, wv, bv, compute_dtype=jnp.float32))
    err_f32 = float(jnp.max(jnp.abs(out_f32 - ref)))
    assert jnp.allclose(out_f32, ref, atol=2e-2, rtol=2e-2), (
        f"f32 kernel mismatch vs reference (max abs err {err_f32:.3e})")

    print("KERNEL_OK")
</pallas_src>

<mosaic_0001>
module attributes {stable_mosaic.version = 11 : i64} {
  func.func @_qkv_proj_kernel(%arg0: i32, %arg1: i32, %arg2: memref<1x8x32xbf16, #tpu.memory_space<vmem>>, %arg3: memref<32x384xbf16, #tpu.memory_space<vmem>>, %arg4: memref<1x384xf32, #tpu.memory_space<vmem>>, %arg5: memref<1x8x128xbf16, #tpu.memory_space<vmem>>, %arg6: memref<1x8x128xbf16, #tpu.memory_space<vmem>>, %arg7: memref<1x8x128xbf16, #tpu.memory_space<vmem>>) attributes {dimension_semantics = [#tpu.dimension_semantics<parallel>, #tpu.dimension_semantics<parallel>], iteration_bounds = array<i64: 2, 1>, scalar_prefetch = 0 : i64, scratch_operands = 0 : i64, tpu.core_type = #tpu.core_type<tc>, window_params = [{transform_indices = @transform_0, window_bounds = array<i64: 1, 8, 32>}, {pipeline_mode = #tpu.pipeline_mode<synchronous>, transform_indices = @transform_1, window_bounds = array<i64: 32, 384>}, {pipeline_mode = #tpu.pipeline_mode<synchronous>, transform_indices = @transform_2, window_bounds = array<i64: 1, 384>}, {transform_indices = @transform_3, window_bounds = array<i64: 1, 8, 128>}, {transform_indices = @transform_4, window_bounds = array<i64: 1, 8, 128>}, {transform_indices = @transform_5, window_bounds = array<i64: 1, 8, 128>}]} {
    %c0 = arith.constant 0 : index
    %c0_0 = arith.constant 0 : index
    %c0_1 = arith.constant 0 : index
    %0 = vector.load %arg2[%c0, %c0_0, %c0_1] : memref<1x8x32xbf16, #tpu.memory_space<vmem>>, vector<1x8x32xbf16>
    %1 = vector.shape_cast %0 : vector<1x8x32xbf16> to vector<8x32xbf16>
    %c0_2 = arith.constant 0 : index
    %c0_3 = arith.constant 0 : index
    %2 = vector.load %arg3[%c0_2, %c0_3] : memref<32x384xbf16, #tpu.memory_space<vmem>>, vector<32x384xbf16>
    %cst = arith.constant dense<0.000000e+00> : vector<8x384xf32>
    %3 = tpu.matmul %1, %2, %cst {dimension_numbers = #tpu.dot_dimension_numbers<[1], [0], [0], [1], [0, 0, 1, 1], [], []>} : vector<8x32xbf16>, vector<32x384xbf16>, vector<8x384xf32> -> vector<8x384xf32>
    %c0_4 = arith.constant 0 : index
    %c0_5 = arith.constant 0 : index
    %4 = vector.load %arg4[%c0_4, %c0_5] : memref<1x384xf32, #tpu.memory_space<vmem>>, vector<1x384xf32>
    %5 = vector.broadcast %4 : vector<1x384xf32> to vector<8x384xf32>
    %6 = arith.addf %3, %5 : vector<8x384xf32>
    %7 = vector.extract_strided_slice %6 {offsets = [0, 0], sizes = [8, 128], strides = [1, 1]} : vector<8x384xf32> to vector<8x128xf32>
    %cst_6 = arith.constant 2.500000e-01 : f32
    %8 = vector.broadcast %cst_6 : f32 to vector<8x128xf32>
    %9 = arith.mulf %7, %8 : vector<8x128xf32>
    %10 = arith.truncf %9 : vector<8x128xf32> to vector<8x128xbf16>
    %c0_7 = arith.constant 0 : index
    %c0_8 = arith.constant 0 : index
    %c0_9 = arith.constant 0 : index
    %11 = vector.load %arg5[%c0_7, %c0_8, %c0_9] : memref<1x8x128xbf16, #tpu.memory_space<vmem>>, vector<1x8x128xbf16>
    %12 = vector.shape_cast %11 : vector<1x8x128xbf16> to vector<8x128xbf16>
    %13 = vector.shape_cast %10 : vector<8x128xbf16> to vector<1x8x128xbf16>
    tpu.vector_store %arg5[%c0_7, %c0_8, %c0_9], %13 {strides = array<i32>} : memref<1x8x128xbf16, #tpu.memory_space<vmem>>, vector<1x8x128xbf16>,
    %14 = vector.extract_strided_slice %6 {offsets = [0, 128], sizes = [8, 128], strides = [1, 1]} : vector<8x384xf32> to vector<8x128xf32>
    %15 = arith.truncf %14 : vector<8x128xf32> to vector<8x128xbf16>
    %c0_10 = arith.constant 0 : index
    %c0_11 = arith.constant 0 : index
    %c0_12 = arith.constant 0 : index
    %16 = vector.load %arg6[%c0_10, %c0_11, %c0_12] : memref<1x8x128xbf16, #tpu.memory_space<vmem>>, vector<1x8x128xbf16>
    %17 = vector.shape_cast %16 : vector<1x8x128xbf16> to vector<8x128xbf16>
    %18 = vector.shape_cast %15 : vector<8x128xbf16> to vector<1x8x128xbf16>
    tpu.vector_store %arg6[%c0_10, %c0_11, %c0_12], %18 {strides = array<i32>} : memref<1x8x128xbf16, #tpu.memory_space<vmem>>, vector<1x8x128xbf16>,
    %19 = vector.extract_strided_slice %6 {offsets = [0, 256], sizes = [8, 128], strides = [1, 1]} : vector<8x384xf32> to vector<8x128xf32>
    %20 = arith.truncf %19 : vector<8x128xf32> to vector<8x128xbf16>
    %c0_13 = arith.constant 0 : index
    %c0_14 = arith.constant 0 : index
    %c0_15 = arith.constant 0 : index
    %21 = vector.load %arg7[%c0_13, %c0_14, %c0_15] : memref<1x8x128xbf16, #tpu.memory_space<vmem>>, vector<1x8x128xbf16>
    %22 = vector.shape_cast %21 : vector<1x8x128xbf16> to vector<8x128xbf16>
    %23 = vector.shape_cast %20 : vector<8x128xbf16> to vector<1x8x128xbf16>
    tpu.vector_store %arg7[%c0_13, %c0_14, %c0_15], %23 {strides = array<i32>} : memref<1x8x128xbf16, #tpu.memory_space<vmem>>, vector<1x8x128xbf16>,
    return
  }
  func.func @transform_0(%arg0: i32, %arg1: i32) -> (i32, i32, i32) {
    %c0_i32 = arith.constant 0 : i32
    %c0_i32_0 = arith.constant 0 : i32
    return %arg0, %arg1, %c0_i32 : i32, i32, i32
  }
  func.func @transform_1(%arg0: i32, %arg1: i32) -> (i32, i32) {
    %c0_i32 = arith.constant 0 : i32
    %c0_i32_0 = arith.constant 0 : i32
    %c0_i32_1 = arith.constant 0 : i32
    return %c0_i32, %c0_i32_0 : i32, i32
  }
  func.func @transform_2(%arg0: i32, %arg1: i32) -> (i32, i32) {
    %c0_i32 = arith.constant 0 : i32
    %c0_i32_0 = arith.constant 0 : i32
    %c0_i32_1 = arith.constant 0 : i32
    return %c0_i32, %c0_i32_0 : i32, i32
  }
  func.func @transform_3(%arg0: i32, %arg1: i32) -> (i32, i32, i32) {
    %c0_i32 = arith.constant 0 : i32
    %c0_i32_0 = arith.constant 0 : i32
    return %arg0, %arg1, %c0_i32 : i32, i32, i32
  }
  func.func @transform_4(%arg0: i32, %arg1: i32) -> (i32, i32, i32) {
    %c0_i32 = arith.constant 0 : i32
    %c0_i32_0 = arith.constant 0 : i32
    return %arg0, %arg1, %c0_i32 : i32, i32, i32
  }
  func.func @transform_5(%arg0: i32, %arg1: i32) -> (i32, i32, i32) {
    %c0_i32 = arith.constant 0 : i32
    %c0_i32_0 = arith.constant 0 : i32
    return %arg0, %arg1, %c0_i32 : i32, i32, i32
  }
}

module attributes {stable_mosaic.version = 11 : i64} {
  func.func @_qkv_proj_kernel(%arg0: i32, %arg1: i32, %arg2: memref<1x8x32xbf16, #tpu.memory_space<vmem>>, %arg3: memref<32x384xbf16, #tpu.memory_space<vmem>>, %arg4: memref<1x384xf32, #tpu.memory_space<vmem>>, %arg5: memref<1x8x128xbf16, #tpu.memory_space<vmem>>, %arg6: memref<1x8x128xbf16, #tpu.memory_space<vmem>>, %arg7: memref<1x8x128xbf16, #tpu.memory_space<vmem>>) attributes {dimension_semantics = [#tpu.dimension_semantics<parallel>, #tpu.dimension_semantics<parallel>], iteration_bounds = array<i64: 2, 1>, scalar_prefetch = 0 : i64, scratch_operands = 0 : i64, tpu.core_type = #tpu.core_type<tc>, window_params = [{transform_indices = @transform_0, window_bounds = array<i64: 1, 8, 32>}, {pipeline_mode = #tpu.pipeline_mode<synchronous>, transform_indices = @transform_1, window_bounds = array<i64: 32, 384>}, {pipeline_mode = #tpu.pipeline_mode<synchronous>, transform_indices = @transform_2, window_bounds = array<i64: 1, 384>}, {transform_indices = @transform_3, window_bounds = array<i64: 1, 8, 128>}, {transform_indices = @transform_4, window_bounds = array<i64: 1, 8, 128>}, {transform_indices = @transform_5, window_bounds = array<i64: 1, 8, 128>}]} {
    %c0 = arith.constant 0 : index
    %c0_0 = arith.constant 0 : index
    %c0_1 = arith.constant 0 : index
    %0 = vector.load %arg2[%c0, %c0_0, %c0_1] : memref<1x8x32xbf16, #tpu.memory_space<vmem>>, vector<1x8x32xbf16>
    %1 = vector.shape_cast %0 : vector<1x8x32xbf16> to vector<8x32xbf16>
    %c0_2 = arith.constant 0 : index
    %c0_3 = arith.constant 0 : index
    %2 = vector.load %arg3[%c0_2, %c0_3] : memref<32x384xbf16, #tpu.memory_space<vmem>>, vector<32x384xbf16>
    %cst = arith.constant dense<0.000000e+00> : vector<8x384xf32>
    %3 = tpu.matmul %1, %2, %cst {dimension_numbers = #tpu.dot_dimension_numbers<[1], [0], [0], [1], [0, 0, 1, 1], [], []>} : vector<8x32xbf16>, vector<32x384xbf16>, vector<8x384xf32> -> vector<8x384xf32>
    %c0_4 = arith.constant 0 : index
    %c0_5 = arith.constant 0 : index
    %4 = vector.load %arg4[%c0_4, %c0_5] : memref<1x384xf32, #tpu.memory_space<vmem>>, vector<1x384xf32>
    %5 = vector.broadcast %4 : vector<1x384xf32> to vector<8x384xf32>
    %6 = arith.addf %3, %5 : vector<8x384xf32>
    %7 = vector.extract_strided_slice %6 {offsets = [0, 0], sizes = [8, 128], strides = [1, 1]} : vector<8x384xf32> to vector<8x128xf32>
    %cst_6 = arith.constant 2.500000e-01 : f32
    %8 = vector.broadcast %cst_6 : f32 to vector<8x128xf32>
    %9 = arith.mulf %7, %8 : vector<8x128xf32>
    %10 = arith.truncf %9 : vector<8x128xf32> to vector<8x128xbf16>
    %c0_7 = arith.constant 0 : index
    %c0_8 = arith.constant 0 : index
    %c0_9 = arith.constant 0 : index
    %11 = vector.load %arg5[%c0_7, %c0_8, %c0_9] : memref<1x8x128xbf16, #tpu.memory_space<vmem>>, vector<1x8x128xbf16>
    %12 = vector.shape_cast %11 : vector<1x8x128xbf16> to vector<8x128xbf16>
    %13 = vector.shape_cast %10 : vector<8x128xbf16> to vector<1x8x128xbf16>
    tpu.vector_store %arg5[%c0_7, %c0_8, %c0_9], %13 {strides = array<i32>} : memref<1x8x128xbf16, #tpu.memory_space<vmem>>, vector<1x8x128xbf16>,
    %14 = vector.extract_strided_slice %6 {offsets = [0, 128], sizes = [8, 128], strides = [1, 1]} : vector<8x384xf32> to vector<8x128xf32>
    %15 = arith.truncf %14 : vector<8x128xf32> to vector<8x128xbf16>
    %c0_10 = arith.constant 0 : index
    %c0_11 = arith.constant 0 : index
    %c0_12 = arith.constant 0 : index
    %16 = vector.load %arg6[%c0_10, %c0_11, %c0_12] : memref<1x8x128xbf16, #tpu.memory_space<vmem>>, vector<1x8x128xbf16>
    %17 = vector.shape_cast %16 : vector<1x8x128xbf16> to vector<8x128xbf16>
    %18 = vector.shape_cast %15 : vector<8x128xbf16> to vector<1x8x128xbf16>
    tpu.vector_store %arg6[%c0_10, %c0_11, %c0_12], %18 {strides = array<i32>} : memref<1x8x128xbf16, #tpu.memory_space<vmem>>, vector<1x8x128xbf16>,
    %19 = vector.extract_strided_slice %6 {offsets = [0, 256], sizes = [8, 128], strides = [1, 1]} : vector<8x384xf32> to vector<8x128xf32>
    %20 = arith.truncf %19 : vector<8x128xf32> to vector<8x128xbf16>
    %c0_13 = arith.constant 0 : index
    %c0_14 = arith.constant 0 : index
    %c0_15 = arith.constant 0 : index
    %21 = vector.load %arg7[%c0_13, %c0_14, %c0_15] : memref<1x8x128xbf16, #tpu.memory_space<vmem>>, vector<1x8x128xbf16>
    %22 = vector.shape_cast %21 : vector<1x8x128xbf16> to vector<8x128xbf16>
    %23 = vector.shape_cast %20 : vector<8x128xbf16> to vector<1x8x128xbf16>
    tpu.vector_store %arg7[%c0_13, %c0_14, %c0_15], %23 {strides = array<i32>} : memref<1x8x128xbf16, #tpu.memory_space<vmem>>, vector<1x8x128xbf16>,
    return
  }
  func.func @transform_0(%arg0: i32, %arg1: i32) -> (i32, i32, i32) {
    %c0_i32 = arith.constant 0 : i32
    %c0_i32_0 = arith.constant 0 : i32
    return %arg0, %arg1, %c0_i32 : i32, i32, i32
  }
  func.func @transform_1(%arg0: i32, %arg1: i32) -> (i32, i32) {
    %c0_i32 = arith.constant 0 : i32
    %c0_i32_0 = arith.constant 0 : i32
    %c0_i32_1 = arith.constant 0 : i32
    return %c0_i32, %c0_i32_0 : i32, i32
  }
  func.func @transform_2(%arg0: i32, %arg1: i32) -> (i32, i32) {
    %c0_i32 = arith.constant 0 : i32
    %c0_i32_0 = arith.constant 0 : i32
    %c0_i32_1 = arith.constant 0 : i32
    return %c0_i32, %c0_i32_0 : i32, i32
  }
  func.func @transform_3(%arg0: i32, %arg1: i32) -> (i32, i32, i32) {
    %c0_i32 = arith.constant 0 : i32
    %c0_i32_0 = arith.constant 0 : i32
    return %arg0, %arg1, %c0_i32 : i32, i32, i32
  }
  func.func @transform_4(%arg0: i32, %arg1: i32) -> (i32, i32, i32) {
    %c0_i32 = arith.constant 0 : i32
    %c0_i32_0 = arith.constant 0 : i32
    return %arg0, %arg1, %c0_i32 : i32, i32, i32
  }
  func.func @transform_5(%arg0: i32, %arg1: i32) -> (i32, i32, i32) {
    %c0_i32 = arith.constant 0 : i32
    %c0_i32_0 = arith.constant 0 : i32
    return %arg0, %arg1, %c0_i32 : i32, i32, i32
  }
}

</mosaic_0001>

<llo_original>
// kernel: tpu_custom_call.1
$region0: #{tpu_custom_call.1}
  #allocation0 [shape = 'u32[]', space=smem, size = 0x4, offset = 0x4, fixed_abs, tag = 'smem constant byte address 0x4 - core index']
  #allocation1 [shape = 'u32[144,128]{1,0:T(1,128)}', space=vmem, size = 0x12000, scoped, tag = 'internal scratch']
  %s0 = inlined_call_operand.hbm [shape: bf16[2,8,32], index: 0, kind: input, shape index: {}]
  %s1 = inlined_call_operand.hbm [shape: bf16[32,384], index: 1, kind: input, shape index: {}]
  %s2 = inlined_call_operand.vmem [shape: f32[1,384], index: 2, kind: input, shape index: {}]
  %s3 = inlined_call_operand.hbm [shape: bf16[2,8,128], index: 3, kind: output, shape index: {0}]
  %s4 = inlined_call_operand.hbm [shape: bf16[2,8,128], index: 4, kind: output, shape index: {1}]
  %s5 = inlined_call_operand.hbm [shape: bf16[2,8,128], index: 5, kind: output, shape index: {2}]
  %6 = xla_tuple %s3, %s4, %s5
  %s7 = sld [smem:[#allocation0]]
  $region69: #{tpu_custom_call.1} parent=0
    _
  %s9 = ssub.s32 1, %s7
  %s10 = scalar_select 0, %s9, %s7
  $region1: #{tpu_custom_call.1} parent=0
    #allocation2 [shape = 'u8[4096]{0}', space=vmem, size = 0x1000, scoped, tag = 'input window, operand 0']
    #allocation3 [shape = 's32[2]{0}', space=sflag, size = 0x8, scoped, tag = 'scoped memory for tpu_custom_call.1']
    #allocation4 [shape = 's32[2]{0}', space=sflag, size = 0x8, scoped, tag = 'scoped memory for tpu_custom_call.1']
    #allocation5 [shape = 'u8[24576]{0}', space=vmem, size = 0x6000, scoped, tag = 'input window, operand 1, single buffered']
    #allocation6 [shape = 's32[1]{0}', space=sflag, size = 0x4, scoped, tag = 'scoped memory for tpu_custom_call.1']
    #allocation7 [shape = 'u8[4096]{0}', space=vmem, size = 0x1000, scoped, tag = 'output window, operand 0']
    #allocation8 [shape = 'u8[4096]{0}', space=vmem, size = 0x1000, scoped, tag = 'output window, operand 1']
    #allocation9 [shape = 's32[2]{0}', space=sflag, size = 0x8, scoped, tag = 'scoped memory for tpu_custom_call.1']
    #allocation10 [shape = 'u8[4096]{0}', space=vmem, size = 0x1000, scoped, tag = 'output window, operand 2']
    %11 = vsyncpa [#allocation3], 0
    %s12 = scalar_lea.sflag [#allocation3], 1
    %13 = vsyncpa %s12, 0
    %14 = vsyncpa [#allocation6], 0
    %15 = vsyncpa [#allocation4], 0
    %s16 = scalar_lea.sflag [#allocation4], 1
    %17 = vsyncpa %s16, 0
    %18 = vsyncpa [#allocation9], 0
    %s19 = scalar_lea.sflag [#allocation9], 1
    %20 = vsyncpa %s19, 0
    loop: start=0, step=1, limit=4
    $region2: #{tpu_custom_call.1} parent=1 // loop_pre_header
      _
    $region3: #{tpu_custom_call.1} parent=1 // loop_header
      %s22 = sphi 0, %s26
      %p23 = scmp.ge.s32.totalorder %s22, 4
      %s29 = sphi 0, %s41
      %s30 = sphi 0, %s37
      %s31 = sphi 0, %s29
      %s32 = sphi 0, %s30
      %s33 = sphi 0, %s31
      %s34 = sphi 0, %s32
      %s46 = sphi 0, %s48
      %s49 = sphi 0, %s46
      %s50 = sphi 0, %s49
      %s66 = sphi 0, %s50
      %s70 = sphi 0, %s70
      %s72 = sphi 0, %s70
      %s73 = sphi 0, %s72
      %s87 = sphi 0, %s73
      %s91 = sphi 0, %s91
      %s93 = sphi 0, %s91
      %s94 = sphi 0, %s93
      %s108 = sphi 0, %s94
      %s116 = sphi 0, %s118
      %s119 = sphi 0, %s116
      %s120 = sphi 0, %s119
      %s136 = sphi 0, %s120
      %s144 = sphi 0, %s146
      %s147 = sphi 0, %s144
      %s148 = sphi 0, %s147
      %s164 = sphi 0, %s148
      %s172 = sphi 0, %s174
      %s175 = sphi 0, %s172
      %s176 = sphi 0, %s175
      %s192 = sphi 0, %s176
    $region4: #{tpu_custom_call.1} parent=1 // loop_header_branch
      %25 = sbr.rel (%p23) target = $region8
    $region5: #{tpu_custom_call.1} parent=1 // loop_body
      %s27 = ssub.s32 %s22, 1
      %s28 = ssub.s32 %s22, 2
      %s35 = sadd.s32 1, %s30
      %p36 = scmp.ge.s32.totalorder %s35, 1
      %s37 = scalar_select %p36, 0, %s35
      %s38 = sadd.s32 1, %s29
      %s39 = scalar_select %p36, %s38, %s29
      %p40 = scmp.ge.s32.totalorder %s39, 2
      %s41 = scalar_select %p40, 0, %s39
      %s42 = ssub.s32 %s29, %s41
      %s43 = ssub.s32 %s30, %s37
      %s44 = sor.u32 %s42, %s43
      %p45 = scmp.eq.s32.totalorder %s44, 0
      %s47 = sadd.s32 %s46, 1
      %s48 = scalar_select %p45, %s46, %s47
      %p51 = pneg %p45
      %p52 = scmp.eq.s32.totalorder %s22, 1
      %p53 = por %p51, %p52
      %p54 = scmp.ne.s32.totalorder %s46, %s49
      %p55 = scmp.eq.s32.totalorder %s22, 0
      %p56 = por %p54, %p55
      %p57 = scmp.ne.s32.totalorder %s46, %s49
      %p58 = scmp.eq.s32.totalorder %s27, 1
      %p59 = por %p57, %p58
      %p60 = scmp.ne.s32.totalorder %s49, %s50
      %p61 = scmp.eq.s32.totalorder %s27, 0
      %p62 = por %p60, %p61
      %p63 = scmp.ne.s32.totalorder %s49, %s50
      %p64 = scmp.eq.s32.totalorder %s28, 1
      %p65 = por %p63, %p64
      %p67 = scmp.ne.s32.totalorder %s50, %s66
      %p68 = scmp.eq.s32.totalorder %s28, 0
      %p69 = por %p67, %p68
      %s71 = sadd.s32 %s70, 1
      %p74 = scmp.eq.s32.totalorder %s22, 1
      %p75 = scmp.ne.s32.totalorder %s70, %s72
      %p76 = scmp.eq.s32.totalorder %s22, 0
      %p77 = por %p75, %p76
      %p78 = scmp.ne.s32.totalorder %s70, %s72
      %p79 = scmp.eq.s32.totalorder %s27, 1
      %p80 = por %p78, %p79
      %p81 = scmp.ne.s32.totalorder %s72, %s73
      %p82 = scmp.eq.s32.totalorder %s27, 0
      %p83 = por %p81, %p82
      %p84 = scmp.ne.s32.totalorder %s72, %s73
      %p85 = scmp.eq.s32.totalorder %s28, 1
      %p86 = por %p84, %p85
      %p88 = scmp.ne.s32.totalorder %s73, %s87
      %p89 = scmp.eq.s32.totalorder %s28, 0
      %p90 = por %p88, %p89
      %s92 = sadd.s32 %s91, 1
      %p95 = scmp.eq.s32.totalorder %s22, 1
      %p96 = scmp.ne.s32.totalorder %s91, %s93
      %p97 = scmp.eq.s32.totalorder %s22, 0
      %p98 = por %p96, %p97
      %p99 = scmp.ne.s32.totalorder %s91, %s93
      %p100 = scmp.eq.s32.totalorder %s27, 1
      %p101 = por %p99, %p100
      %p102 = scmp.ne.s32.totalorder %s93, %s94
      %p103 = scmp.eq.s32.totalorder %s27, 0
      %p104 = por %p102, %p103
      %p105 = scmp.ne.s32.totalorder %s93, %s94
      %p106 = scmp.eq.s32.totalorder %s28, 1
      %p107 = por %p105, %p106
      %p109 = scmp.ne.s32.totalorder %s94, %s108
      %p110 = scmp.eq.s32.totalorder %s28, 0
      %p111 = por %p109, %p110
      %s112 = ssub.s32 %s29, %s41
      %s113 = ssub.s32 %s30, %s37
      %s114 = sor.u32 %s112, %s113
      %p115 = scmp.eq.s32.totalorder %s114, 0
      %s117 = sadd.s32 %s116, 1
      %s118 = scalar_select %p115, %s116, %s117
      %p121 = pneg %p115
      %p122 = scmp.eq.s32.totalorder %s22, 1
      %p123 = por %p121, %p122
      %p124 = scmp.ne.s32.totalorder %s116, %s119
      %p125 = scmp.eq.s32.totalorder %s22, 0
      %p126 = por %p124, %p125
      %p127 = scmp.ne.s32.totalorder %s116, %s119
      %p128 = scmp.eq.s32.totalorder %s27, 1
      %p129 = por %p127, %p128
      %p130 = scmp.ne.s32.totalorder %s119, %s120
      %p131 = scmp.eq.s32.totalorder %s27, 0
      %p132 = por %p130, %p131
      %p133 = scmp.ne.s32.totalorder %s119, %s120
      %p134 = scmp.eq.s32.totalorder %s28, 1
      %p135 = por %p133, %p134
      %p137 = scmp.ne.s32.totalorder %s120, %s136
      %p138 = scmp.eq.s32.totalorder %s28, 0
      %p139 = por %p137, %p138
      %s140 = ssub.s32 %s29, %s41
      %s141 = ssub.s32 %s30, %s37
      %s142 = sor.u32 %s140, %s141
      %p143 = scmp.eq.s32.totalorder %s142, 0
      %s145 = sadd.s32 %s144, 1
      %s146 = scalar_select %p143, %s144, %s145
      %p149 = pneg %p143
      %p150 = scmp.eq.s32.totalorder %s22, 1
      %p151 = por %p149, %p150
      %p152 = scmp.ne.s32.totalorder %s144, %s147
      %p153 = scmp.eq.s32.totalorder %s22, 0
      %p154 = por %p152, %p153
      %p155 = scmp.ne.s32.totalorder %s144, %s147
      %p156 = scmp.eq.s32.totalorder %s27, 1
      %p157 = por %p155, %p156
      %p158 = scmp.ne.s32.totalorder %s147, %s148
      %p159 = scmp.eq.s32.totalorder %s27, 0
      %p160 = por %p158, %p159
      %p161 = scmp.ne.s32.totalorder %s147, %s148
      %p162 = scmp.eq.s32.totalorder %s28, 1
      %p163 = por %p161, %p162
      %p165 = scmp.ne.s32.totalorder %s148, %s164
      %p166 = scmp.eq.s32.totalorder %s28, 0
      %p167 = por %p165, %p166
      %s168 = ssub.s32 %s29, %s41
      %s169 = ssub.s32 %s30, %s37
      %s170 = sor.u32 %s168, %s169
      %p171 = scmp.eq.s32.totalorder %s170, 0
      %s173 = sadd.s32 %s172, 1
      %s174 = scalar_select %p171, %s172, %s173
      %p177 = pneg %p171
      %p178 = scmp.eq.s32.totalorder %s22, 1
      %p179 = por %p177, %p178
      %p180 = scmp.ne.s32.totalorder %s172, %s175
      %p181 = scmp.eq.s32.totalorder %s22, 0
      %p182 = por %p180, %p181
      %p183 = scmp.ne.s32.totalorder %s172, %s175
      %p184 = scmp.eq.s32.totalorder %s27, 1
      %p185 = por %p183, %p184
      %p186 = scmp.ne.s32.totalorder %s175, %s176
      %p187 = scmp.eq.s32.totalorder %s27, 0
      %p188 = por %p186, %p187
      %p189 = scmp.ne.s32.totalorder %s175, %s176
      %p190 = scmp.eq.s32.totalorder %s28, 1
      %p191 = por %p189, %p190
      %p193 = scmp.ne.s32.totalorder %s176, %s192
      %p194 = scmp.eq.s32.totalorder %s28, 0
      %p195 = por %p193, %p194
      %p196 = scmp.le.s32.totalorder 1, %s22
      %p197 = scmp.lt.s32.totalorder %s22, 3
      %p198 = pnand %p196, %p197
      %p199 = pneg %p198
      // Predicated region
      $region9: #{tpu_custom_call.1} parent=5 // pred_check
        _
      $region10: #{tpu_custom_call.1} parent=5 // pred_check_branch
        %201 = sbr.rel (%p198) target = $region12
      $region11: #{tpu_custom_call.1} parent=5 // pred_region
        %s202 = ssub.s32 %s22, 1
        // Predicated region
        $region13: #{tpu_custom_call.1} parent=11 // pred_check
          %p203 = pneg %p83
        $region14: #{tpu_custom_call.1} parent=11 // pred_check_branch
          %205 = sbr.rel (%p203) target = $region16
        $region15: #{tpu_custom_call.1} parent=11 // pred_region
          %s207 = ssub.s32 768, 768
          %208 = vsyncadd [#allocation6], %s207
          %s209 = sshll.u32 [#allocation5], 4
          %s210 = int_to_ptr.vmem [resolvable:$true] %s209
          %215 = dma.hbm_to_vmem [thread:$0]  %s1, 768, %s210, [#allocation6], 192, 192, 12
        $region16: #{tpu_custom_call.1} parent=11 // pred_fallthru
          _
        // Predicated region
        $region17: #{tpu_custom_call.1} parent=11 // pred_check
          %p216 = pneg %p104
        $region18: #{tpu_custom_call.1} parent=11 // pred_check_branch
          %218 = sbr.rel (%p216) target = $region20
        $region19: #{tpu_custom_call.1} parent=11 // pred_region
          _
        $region20: #{tpu_custom_call.1} parent=11 // pred_fallthru
          _
      $region12: #{tpu_custom_call.1} parent=5 // pred_fallthru
        _
      %p219 = scmp.lt.s32.totalorder %s22, 2
      // Predicated region
      $region21: #{tpu_custom_call.1} parent=5 // pred_check
        %p220 = pneg %p219
      $region22: #{tpu_custom_call.1} parent=5 // pred_check_branch
        %222 = sbr.rel (%p220) target = $region24
      $region23: #{tpu_custom_call.1} parent=5 // pred_region
        // Predicated region
        $region25: #{tpu_custom_call.1} parent=23 // pred_check
          %p223 = pneg %p56
        $region26: #{tpu_custom_call.1} parent=23 // pred_check_branch
          %225 = sbr.rel (%p223) target = $region28
        $region27: #{tpu_custom_call.1} parent=23 // pred_region
          %s226 = sand.u32 %s46, 1
          %s227 = scalar_lea.sflag [#allocation3], %s226
          %s228 = sand.u32 %s46, 1
          %s229 = smul.addr %s228, 4
          %s230 = scalar_lea.vmem [#allocation2], %s229
          %s232 = ssub.s32 64, 64
          %233 = vsyncadd %s227, %s232
          %s234 = sadd.s32 %s30, %s29
          %s235 = smul.addr %s234, 64
          %s236 = scalar_lea.hbm %s0, %s235
          %s238 = sshll.u32 %s230, 4
          %s239 = int_to_ptr.vmem [resolvable:$true] %s238
          %241 = dma.hbm_to_vmem [thread:$0]  %s236, 64, %s239, %s227
        $region28: #{tpu_custom_call.1} parent=23 // pred_fallthru
          _
      $region24: #{tpu_custom_call.1} parent=5 // pred_fallthru
        _
      %p242 = scmp.le.s32.totalorder 1, %s22
      %p243 = scmp.lt.s32.totalorder %s22, 3
      %p244 = pnand %p242, %p243
      %p245 = pneg %p244
      // Predicated region
      $region29: #{tpu_custom_call.1} parent=5 // pred_check
        _
      $region30: #{tpu_custom_call.1} parent=5 // pred_check_branch
        %247 = sbr.rel (%p244) target = $region32
      $region31: #{tpu_custom_call.1} parent=5 // pred_region
        %s248 = ssub.s32 %s22, 1
        %s249 = sand.u32 %s49, 1
        %s250 = scalar_lea.sflag [#allocation3], %s249
        %s251 = sand.u32 %s49, 1
        %s252 = smul.addr %s251, 4
        %s253 = scalar_lea.vmem [#allocation2], %s252
        // Predicated region
        $region33: #{tpu_custom_call.1} parent=31 // pred_check
          %p254 = pneg %p62
        $region34: #{tpu_custom_call.1} parent=31 // pred_check_branch
          %256 = sbr.rel (%p254) target = $region36
        $region35: #{tpu_custom_call.1} parent=31 // pred_region
          %257 = dma.done %s250, 64
        $region36: #{tpu_custom_call.1} parent=31 // pred_fallthru
          _
        // Predicated region
        $region37: #{tpu_custom_call.1} parent=31 // pred_check
          %p258 = pneg %p83
        $region38: #{tpu_custom_call.1} parent=31 // pred_check_branch
          %260 = sbr.rel (%p258) target = $region40
        $region39: #{tpu_custom_call.1} parent=31 // pred_region
          %261 = dma.done [#allocation6], 768
        $region40: #{tpu_custom_call.1} parent=31 // pred_fallthru
          _
        %s262 = sand.u32 %s49, 1
        %s263 = scalar_lea.sflag [#allocation3], %s262
        %s264 = sand.u32 %s49, 1
        %s265 = smul.addr %s264, 4
        %s266 = scalar_lea.vmem [#allocation2], %s265
        %p267 = pneg %p62
        %p268 = pneg %p59
        %p269 = pneg %p83
        %p270 = pneg %p80
        %p271 = pneg %p104
        %p272 = pneg %p101
        %p273 = pneg %p132
        %p274 = pneg %p129
        %s275 = sand.u32 %s119, 1
        %s276 = scalar_lea.sflag [#allocation4], %s275
        %s277 = sand.u32 %s119, 1
        %s278 = smul.addr %s277, 4
        %s279 = scalar_lea.vmem [#allocation7], %s278
        %p280 = pneg %p160
        %p281 = pneg %p157
        %s282 = sand.u32 %s27, 1
        %s283 = scalar_lea.sflag [#allocation9], %s282
        %s284 = sand.u32 %s147, 1
        %s285 = smul.addr %s284, 4
        %s286 = scalar_lea.vmem [#allocation8], %s285
        %p287 = pneg %p188
        %p288 = pneg %p185
        %s289 = sand.u32 %s27, 1
        %s290 = scalar_lea.sflag [#allocation9], %s289
        %s291 = sand.u32 %s175, 1
        %s292 = smul.addr %s291, 4
        %s293 = scalar_lea.vmem [#allocation10], %s292
        %v295 = vld [vmem:[%s253] sm:$0xf]
        %v296 = vld [vmem:[#allocation5] sm:$0xff]
        %v297 = vld [vmem:[#allocation5 + $0x8] sm:$0xf]
        %v298 = vld [vmem:[#allocation5 + $0xc] sm:$0xff]
        %v299 = vld [vmem:[#allocation5 + $0x14] sm:$0xf]
        %v300 = vld [vmem:[#allocation5 + $0x18] sm:$0xff]
        %v301 = vld [vmem:[#allocation5 + $0x20] sm:$0xf]
        %v302 = vld [vmem:[#allocation5 + $0x24] sm:$0xff]
        %v303 = vld [vmem:[#allocation5 + $0x2c] sm:$0xf]
        %v304 = vld [vmem:[%s2] sm:$0x7]
        %v306 = vlaneseq
        %v307 = vshrl.u32 %v306, 7
        %v308 = vsub.s32 0, %v307
        %v309 = vrot.slane %v304, %v308
        %v310 = vlaneseq
        %v311 = vshrl.u32 %v310, 7
        %v312 = vsub.s32 1, %v311
        %v313 = vrot.slane %v304, %v312
        %v314 = vlaneseq
        %v315 = vshrl.u32 %v314, 7
        %v316 = vsub.s32 2, %v315
        %v317 = vrot.slane %v304, %v316
        %v329 = vunpack.c.l.b16 %v296
        %v330 = vunpack.c.h.b16 %v296
        %v331 = vunpack.c.l.b16 %v297
        %v332 = vunpack.c.l.b16 %v298
        %v333 = vunpack.c.h.b16 %v298
        %v334 = vunpack.c.l.b16 %v299
        %v335 = vunpack.c.l.b16 %v300
        %v336 = vunpack.c.h.b16 %v300
        %v337 = vunpack.c.l.b16 %v301
        %v338 = vunpack.c.l.b16 %v302
        %v339 = vunpack.c.h.b16 %v302
        %v340 = vunpack.c.l.b16 %v303
        %v341 = vpack.c.b16 %v332, %v329
        %v342 = vpack.c.b16 %v333, %v330
        %v343 = vpack.c.b16 %v334, %v331
        %v344 = vpack.c.b16 %v338, %v335
        %v345 = vpack.c.b16 %v339, %v336
        %v346 = vpack.c.b16 %v340, %v337
        %vm353 = vcmask 261120
        %v355 = vsel %vm353, %v295, 0
        %357 = vmatprep.subr.bf16.mxu0 %v342
        %358 = vmatpush1.bf16.msra.mxu0 %v341
        %359 = vmatprep.subr.bf16.mxu0 %v345
        %360 = vmatpush1.bf16.msra.mxu0 %v344
        %361 = vmatprep.subr.bf16.mxu0 0
        %362 = vmatpush1.bf16.msra.mxu0 0
        %363 = vmatprep.subr.bf16.mxu0 0
        %364 = vmatpush1.bf16.msra.mxu0 0
        %365 = vmatprep.subr.bf16.mxu0 0
        %366 = vmatpush1.bf16.msra.mxu0 0
        %367 = vmatprep.subr.bf16.mxu0 0
        %368 = vmatpush1.bf16.msra.mxu0 0
        %369 = vmatprep.subr.bf16.mxu0 0
        %370 = vmatpush1.bf16.msra.mxu0 0
        %371 = vmatprep.subr.bf16.mxu0 0
        %372 = vmatpush1.bf16.msra.mxu0 0
        %373 = vmatprep.subr.bf16.mxu0 0
        %374 = vmatpush1.bf16.msra.mxu0 0
        %375 = vmatprep.subr.bf16.mxu0 0
        %376 = vmatpush1.bf16.msra.mxu0 0
        %377 = vmatprep.subr.bf16.mxu0 0
        %378 = vmatpush1.bf16.msra.mxu0 0
        %379 = vmatprep.subr.bf16.mxu0 0
        %380 = vmatpush1.bf16.msra.mxu0 0
        %381 = vmatprep.subr.bf16.mxu0 0
        %382 = vmatpush1.bf16.msra.mxu0 0
        %383 = vmatprep.subr.bf16.mxu0 0
        %384 = vmatpush1.bf16.msra.mxu0 0
        %385 = vmatprep.subr.bf16.mxu0 0
        %386 = vmatpush1.bf16.msra.mxu0 0
        %387 = vmatprep.subr.bf16.mxu0 0
        %388 = vmatpush1.bf16.msra.mxu0 0
        %389 = vmatprep.mubr.bf16.mxu0 0
        %390 = vmatmul.mubr.bf16.gmra.mrb[0].mxu0 %v355
        %v391 = vpop.f32.mrb[0].mxu0
        %v392 = vadd.f32 %v309, %v391
        %v393 = vpop.f32.mrb[0].mxu0
        %v394 = vadd.f32 %v313, %v393
        %v395 = vpop.f32.mrb[0].mxu0
        %v396 = vpop.f32.mrb[0].mxu0
        %397 = vdwg.mxu0
        %398 = vmatprep.subr.bf16.mxu0 0
        %399 = vmatpush1.bf16.msra.mxu0 %v343
        %400 = vmatprep.subr.bf16.mxu0 0
        %401 = vmatpush1.bf16.msra.mxu0 %v346
        %402 = vmatprep.subr.bf16.mxu0 0
        %403 = vmatpush1.bf16.msra.mxu0 0
        %404 = vmatprep.subr.bf16.mxu0 0
        %405 = vmatpush1.bf16.msra.mxu0 0
        %406 = vmatprep.subr.bf16.mxu0 0
        %407 = vmatpush1.bf16.msra.mxu0 0
        %408 = vmatprep.subr.bf16.mxu0 0
        %409 = vmatpush1.bf16.msra.mxu0 0
        %410 = vmatprep.subr.bf16.mxu0 0
        %411 = vmatpush1.bf16.msra.mxu0 0
        %412 = vmatprep.subr.bf16.mxu0 0
        %413 = vmatpush1.bf16.msra.mxu0 0
        %414 = vmatprep.subr.bf16.mxu0 0
        %415 = vmatpush1.bf16.msra.mxu0 0
        %416 = vmatprep.subr.bf16.mxu0 0
        %417 = vmatpush1.bf16.msra.mxu0 0
        %418 = vmatprep.subr.bf16.mxu0 0
        %419 = vmatpush1.bf16.msra.mxu0 0
        %420 = vmatprep.subr.bf16.mxu0 0
        %421 = vmatpush1.bf16.msra.mxu0 0
        %422 = vmatprep.subr.bf16.mxu0 0
        %423 = vmatpush1.bf16.msra.mxu0 0
        %424 = vmatprep.subr.bf16.mxu0 0
        %425 = vmatpush1.bf16.msra.mxu0 0
        %426 = vmatprep.subr.bf16.mxu0 0
        %427 = vmatpush1.bf16.msra.mxu0 0
        %428 = vmatprep.subr.bf16.mxu0 0
        %429 = vmatpush1.bf16.msra.mxu0 0
        %430 = vmatprep.mubr.bf16.mxu0 0
        %431 = vmatmul.mubr.bf16.gmra.mrb[0].mxu0 %v355
        %v432 = vpop.f32.mrb[0].mxu0
        %v433 = vadd.f32 %v317, %v432
        %v434 = vpop.f32.mrb[0].mxu0
        %v435 = vpop.f32.mrb[0].mxu0
        %v436 = vpop.f32.mrb[0].mxu0
        %437 = vdwg.mxu0
        %v438 = vmul.f32 %v392, 0.25
        %v439 = vpack.c.bf16 %v438, %v438
        %440 = vst [vmem:[%s279] sm:$0xf] %v439
        %v441 = vpack.c.bf16 %v394, %v394
        %442 = vst [vmem:[%s286] sm:$0xf] %v441
        %v443 = vpack.c.bf16 %v433, %v433
        %444 = vst [vmem:[%s293] sm:$0xf] %v443
        %s445 = sand.u32 %s119, 1
        %s446 = scalar_lea.sflag [#allocation4], %s445
        %s447 = sand.u32 %s119, 1
        %s448 = smul.addr %s447, 4
        %s449 = scalar_lea.vmem [#allocation7], %s448
        %s450 = sand.u32 %s27, 1
        %s451 = scalar_lea.sflag [#allocation9], %s450
        %s452 = sand.u32 %s147, 1
        %s453 = smul.addr %s452, 4
        %s454 = scalar_lea.vmem [#allocation8], %s453
        %s455 = sand.u32 %s27, 1
        %s456 = scalar_lea.sflag [#allocation9], %s455
        %s457 = sand.u32 %s175, 1
        %s458 = smul.addr %s457, 4
        %s459 = scalar_lea.vmem [#allocation10], %s458
        // Predicated region
        $region41: #{tpu_custom_call.1} parent=31 // pred_check
          %p460 = pneg %p129
        $region42: #{tpu_custom_call.1} parent=31 // pred_check_branch
          %462 = sbr.rel (%p460) target = $region44
        $region43: #{tpu_custom_call.1} parent=31 // pred_region
          %s464 = ssub.s32 64, 64
          %465 = vsyncadd %s446, %s464
          %s466 = sadd.s32 %s32, %s31
          %s467 = smul.addr %s466, 64
          %s468 = scalar_lea.hbm %s3, %s467
          %s470 = sshll.u32 %s449, 4
          %s471 = int_to_ptr.vmem [resolvable:$true] %s470
          %473 = dma.vmem_to_hbm [thread:$0]  %s471, 64, %s468, %s446
        $region44: #{tpu_custom_call.1} parent=31 // pred_fallthru
          _
        // Predicated region
        $region45: #{tpu_custom_call.1} parent=31 // pred_check
          %p474 = pneg %p157
        $region46: #{tpu_custom_call.1} parent=31 // pred_check_branch
          %476 = sbr.rel (%p474) target = $region48
        $region47: #{tpu_custom_call.1} parent=31 // pred_region
          %s478 = ssub.s32 64, 64
          %479 = vsyncadd %s451, %s478
          %s480 = sadd.s32 %s32, %s31
          %s481 = smul.addr %s480, 64
          %s482 = scalar_lea.hbm %s4, %s481
          %s484 = sshll.u32 %s454, 4
          %s485 = int_to_ptr.vmem [resolvable:$true] %s484
          %487 = dma.vmem_to_hbm [thread:$0]  %s485, 64, %s482, %s451
        $region48: #{tpu_custom_call.1} parent=31 // pred_fallthru
          _
        // Predicated region
        $region49: #{tpu_custom_call.1} parent=31 // pred_check
          %p488 = pneg %p185
        $region50: #{tpu_custom_call.1} parent=31 // pred_check_branch
          %490 = sbr.rel (%p488) target = $region52
        $region51: #{tpu_custom_call.1} parent=31 // pred_region
          %s492 = ssub.s32 64, 64
          %493 = vsyncadd %s456, %s492
          %s494 = sadd.s32 %s32, %s31
          %s495 = smul.addr %s494, 64
          %s496 = scalar_lea.hbm %s5, %s495
          %s498 = sshll.u32 %s459, 4
          %s499 = int_to_ptr.vmem [resolvable:$true] %s498
          %501 = dma.vmem_to_hbm [thread:$0]  %s499, 64, %s496, %s456
        $region52: #{tpu_custom_call.1} parent=31 // pred_fallthru
          _
      $region32: #{tpu_custom_call.1} parent=5 // pred_fallthru
        _
      %p502 = scmp.le.s32.totalorder 2, %s22
      // Predicated region
      $region53: #{tpu_custom_call.1} parent=5 // pred_check
        %p503 = pneg %p502
      $region54: #{tpu_custom_call.1} parent=5 // pred_check_branch
        %505 = sbr.rel (%p503) target = $region56
      $region55: #{tpu_custom_call.1} parent=5 // pred_region
        %s506 = ssub.s32 %s22, 2
        // Predicated region
        $region57: #{tpu_custom_call.1} parent=55 // pred_check
          %p507 = pneg %p135
        $region58: #{tpu_custom_call.1} parent=55 // pred_check_branch
          %509 = sbr.rel (%p507) target = $region60
        $region59: #{tpu_custom_call.1} parent=55 // pred_region
          %s510 = sand.u32 %s120, 1
          %s511 = scalar_lea.sflag [#allocation4], %s510
          %s512 = sand.u32 %s120, 1
          %s513 = smul.addr %s512, 4
          %s514 = scalar_lea.vmem [#allocation7], %s513
          %515 = dma.done %s511, 64
        $region60: #{tpu_custom_call.1} parent=55 // pred_fallthru
          _
        // Predicated region
        $region61: #{tpu_custom_call.1} parent=55 // pred_check
          %p516 = pneg %p163
        $region62: #{tpu_custom_call.1} parent=55 // pred_check_branch
          %518 = sbr.rel (%p516) target = $region64
        $region63: #{tpu_custom_call.1} parent=55 // pred_region
          %s519 = sand.u32 %s28, 1
          %s520 = scalar_lea.sflag [#allocation9], %s519
          %s521 = sand.u32 %s148, 1
          %s522 = smul.addr %s521, 4
          %s523 = scalar_lea.vmem [#allocation8], %s522
          %524 = dma.done %s520, 64
        $region64: #{tpu_custom_call.1} parent=55 // pred_fallthru
          _
        // Predicated region
        $region65: #{tpu_custom_call.1} parent=55 // pred_check
          %p525 = pneg %p191
        $region66: #{tpu_custom_call.1} parent=55 // pred_check_branch
          %527 = sbr.rel (%p525) target = $region68
        $region67: #{tpu_custom_call.1} parent=55 // pred_region
          %s528 = sand.u32 %s28, 1
          %s529 = scalar_lea.sflag [#allocation9], %s528
          %s530 = sand.u32 %s176, 1
          %s531 = smul.addr %s530, 4
          %s532 = scalar_lea.vmem [#allocation10], %s531
          %533 = dma.done %s529, 64
        $region68: #{tpu_custom_call.1} parent=55 // pred_fallthru
          _
      $region56: #{tpu_custom_call.1} parent=5 // pred_fallthru
        _
    $region6: #{tpu_custom_call.1} parent=1 // loop_footer
      %s26 = sadd.s32 1, %s22
    $region7: #{tpu_custom_call.1} parent=1 // loop_footer_branch
      %21 = sbr.rel target = $region3
    $region8: #{tpu_custom_call.1} parent=1 // loop_exit
      _
    %534 = vsyncpa [#allocation3], 1
    %s535 = scalar_lea.sflag [#allocation3], 1
    %536 = vsyncpa %s535, 1
    %537 = vsyncpa [#allocation6], 1
    %538 = vsyncpa [#allocation4], 1
    %s539 = scalar_lea.sflag [#allocation4], 1
    %540 = vsyncpa %s539, 1
    %541 = vsyncpa [#allocation9], 1
    %s542 = scalar_lea.sflag [#allocation9], 1
    %543 = vsyncpa %s542, 1

// kernel: tpu_custom_call.1
$region0: #{tpu_custom_call.1}
  #allocation0 [shape = 'u32[]', space=smem, size = 0x4, offset = 0x4, fixed_abs, tag = 'smem constant byte address 0x4 - core index']
  #allocation1 [shape = 'u32[144,128]{1,0:T(1,128)}', space=vmem, size = 0x12000, scoped, tag = 'internal scratch']
  %s0 = inlined_call_operand.hbm [shape: bf16[2,8,32], index: 0, kind: input, shape index: {}]
  %s1 = inlined_call_operand.hbm [shape: bf16[32,384], index: 1, kind: input, shape index: {}]
  %s2 = inlined_call_operand.vmem [shape: f32[1,384], index: 2, kind: input, shape index: {}]
  %s3 = inlined_call_operand.hbm [shape: bf16[2,8,128], index: 3, kind: output, shape index: {0}]
  %s4 = inlined_call_operand.hbm [shape: bf16[2,8,128], index: 4, kind: output, shape index: {1}]
  %s5 = inlined_call_operand.hbm [shape: bf16[2,8,128], index: 5, kind: output, shape index: {2}]
  %6 = xla_tuple %s3, %s4, %s5
  %s7 = sld [smem:[#allocation0]]
  $region69: #{tpu_custom_call.1} parent=0
    _
  %s9 = ssub.s32 1, %s7
  %s10 = scalar_select 0, %s9, %s7
  $region1: #{tpu_custom_call.1} parent=0
    #allocation2 [shape = 'u8[4096]{0}', space=vmem, size = 0x1000, scoped, tag = 'input window, operand 0']
    #allocation3 [shape = 's32[2]{0}', space=sflag, size = 0x8, scoped, tag = 'scoped memory for tpu_custom_call.1']
    #allocation4 [shape = 's32[2]{0}', space=sflag, size = 0x8, scoped, tag = 'scoped memory for tpu_custom_call.1']
    #allocation5 [shape = 'u8[24576]{0}', space=vmem, size = 0x6000, scoped, tag = 'input window, operand 1, single buffered']
    #allocation6 [shape = 's32[1]{0}', space=sflag, size = 0x4, scoped, tag = 'scoped memory for tpu_custom_call.1']
    #allocation7 [shape = 'u8[4096]{0}', space=vmem, size = 0x1000, scoped, tag = 'output window, operand 0']
    #allocation8 [shape = 'u8[4096]{0}', space=vmem, size = 0x1000, scoped, tag = 'output window, operand 1']
    #allocation9 [shape = 's32[2]{0}', space=sflag, size = 0x8, scoped, tag = 'scoped memory for tpu_custom_call.1']
    #allocation10 [shape = 'u8[4096]{0}', space=vmem, size = 0x1000, scoped, tag = 'output window, operand 2']
    %11 = vsyncpa [#allocation3], 0
    %s12 = scalar_lea.sflag [#allocation3], 1
    %13 = vsyncpa %s12, 0
    %14 = vsyncpa [#allocation6], 0
    %15 = vsyncpa [#allocation4], 0
    %s16 = scalar_lea.sflag [#allocation4], 1
    %17 = vsyncpa %s16, 0
    %18 = vsyncpa [#allocation9], 0
    %s19 = scalar_lea.sflag [#allocation9], 1
    %20 = vsyncpa %s19, 0
    loop: start=0, step=1, limit=4
    $region2: #{tpu_custom_call.1} parent=1 // loop_pre_header
      _
    $region3: #{tpu_custom_call.1} parent=1 // loop_header
      %s22 = sphi 0, %s26
      %p23 = scmp.ge.s32.totalorder %s22, 4
      %s29 = sphi 0, %s41
      %s30 = sphi 0, %s37
      %s31 = sphi 0, %s29
      %s32 = sphi 0, %s30
      %s33 = sphi 0, %s31
      %s34 = sphi 0, %s32
      %s46 = sphi 0, %s48
      %s49 = sphi 0, %s46
      %s50 = sphi 0, %s49
      %s66 = sphi 0, %s50
      %s70 = sphi 0, %s70
      %s72 = sphi 0, %s70
      %s73 = sphi 0, %s72
      %s87 = sphi 0, %s73
      %s91 = sphi 0, %s91
      %s93 = sphi 0, %s91
      %s94 = sphi 0, %s93
      %s108 = sphi 0, %s94
      %s116 = sphi 0, %s118
      %s119 = sphi 0, %s116
      %s120 = sphi 0, %s119
      %s136 = sphi 0, %s120
      %s144 = sphi 0, %s146
      %s147 = sphi 0, %s144
      %s148 = sphi 0, %s147
      %s164 = sphi 0, %s148
      %s172 = sphi 0, %s174
      %s175 = sphi 0, %s172
      %s176 = sphi 0, %s175
      %s192 = sphi 0, %s176
    $region4: #{tpu_custom_call.1} parent=1 // loop_header_branch
      %25 = sbr.rel (%p23) target = $region8
    $region5: #{tpu_custom_call.1} parent=1 // loop_body
      %s27 = ssub.s32 %s22, 1
      %s28 = ssub.s32 %s22, 2
      %s35 = sadd.s32 1, %s30
      %p36 = scmp.ge.s32.totalorder %s35, 1
      %s37 = scalar_select %p36, 0, %s35
      %s38 = sadd.s32 1, %s29
      %s39 = scalar_select %p36, %s38, %s29
      %p40 = scmp.ge.s32.totalorder %s39, 2
      %s41 = scalar_select %p40, 0, %s39
      %s42 = ssub.s32 %s29, %s41
      %s43 = ssub.s32 %s30, %s37
      %s44 = sor.u32 %s42, %s43
      %p45 = scmp.eq.s32.totalorder %s44, 0
      %s47 = sadd.s32 %s46, 1
      %s48 = scalar_select %p45, %s46, %s47
      %p51 = pneg %p45
      %p52 = scmp.eq.s32.totalorder %s22, 1
      %p53 = por %p51, %p52
      %p54 = scmp.ne.s32.totalorder %s46, %s49
      %p55 = scmp.eq.s32.totalorder %s22, 0
      %p56 = por %p54, %p55
      %p57 = scmp.ne.s32.totalorder %s46, %s49
      %p58 = scmp.eq.s32.totalorder %s27, 1
      %p59 = por %p57, %p58
      %p60 = scmp.ne.s32.totalorder %s49, %s50
      %p61 = scmp.eq.s32.totalorder %s27, 0
      %p62 = por %p60, %p61
      %p63 = scmp.ne.s32.totalorder %s49, %s50
      %p64 = scmp.eq.s32.totalorder %s28, 1
      %p65 = por %p63, %p64
      %p67 = scmp.ne.s32.totalorder %s50, %s66
      %p68 = scmp.eq.s32.totalorder %s28, 0
      %p69 = por %p67, %p68
      %s71 = sadd.s32 %s70, 1
      %p74 = scmp.eq.s32.totalorder %s22, 1
      %p75 = scmp.ne.s32.totalorder %s70, %s72
      %p76 = scmp.eq.s32.totalorder %s22, 0
      %p77 = por %p75, %p76
      %p78 = scmp.ne.s32.totalorder %s70, %s72
      %p79 = scmp.eq.s32.totalorder %s27, 1
      %p80 = por %p78, %p79
      %p81 = scmp.ne.s32.totalorder %s72, %s73
      %p82 = scmp.eq.s32.totalorder %s27, 0
      %p83 = por %p81, %p82
      %p84 = scmp.ne.s32.totalorder %s72, %s73
      %p85 = scmp.eq.s32.totalorder %s28, 1
      %p86 = por %p84, %p85
      %p88 = scmp.ne.s32.totalorder %s73, %s87
      %p89 = scmp.eq.s32.totalorder %s28, 0
      %p90 = por %p88, %p89
      %s92 = sadd.s32 %s91, 1
      %p95 = scmp.eq.s32.totalorder %s22, 1
      %p96 = scmp.ne.s32.totalorder %s91, %s93
      %p97 = scmp.eq.s32.totalorder %s22, 0
      %p98 = por %p96, %p97
      %p99 = scmp.ne.s32.totalorder %s91, %s93
      %p100 = scmp.eq.s32.totalorder %s27, 1
      %p101 = por %p99, %p100
      %p102 = scmp.ne.s32.totalorder %s93, %s94
      %p103 = scmp.eq.s32.totalorder %s27, 0
      %p104 = por %p102, %p103
      %p105 = scmp.ne.s32.totalorder %s93, %s94
      %p106 = scmp.eq.s32.totalorder %s28, 1
      %p107 = por %p105, %p106
      %p109 = scmp.ne.s32.totalorder %s94, %s108
      %p110 = scmp.eq.s32.totalorder %s28, 0
      %p111 = por %p109, %p110
      %s112 = ssub.s32 %s29, %s41
      %s113 = ssub.s32 %s30, %s37
      %s114 = sor.u32 %s112, %s113
      %p115 = scmp.eq.s32.totalorder %s114, 0
      %s117 = sadd.s32 %s116, 1
      %s118 = scalar_select %p115, %s116, %s117
      %p121 = pneg %p115
      %p122 = scmp.eq.s32.totalorder %s22, 1
      %p123 = por %p121, %p122
      %p124 = scmp.ne.s32.totalorder %s116, %s119
      %p125 = scmp.eq.s32.totalorder %s22, 0
      %p126 = por %p124, %p125
      %p127 = scmp.ne.s32.totalorder %s116, %s119
      %p128 = scmp.eq.s32.totalorder %s27, 1
      %p129 = por %p127, %p128
      %p130 = scmp.ne.s32.totalorder %s119, %s120
      %p131 = scmp.eq.s32.totalorder %s27, 0
      %p132 = por %p130, %p131
      %p133 = scmp.ne.s32.totalorder %s119, %s120
      %p134 = scmp.eq.s32.totalorder %s28, 1
      %p135 = por %p133, %p134
      %p137 = scmp.ne.s32.totalorder %s120, %s136
      %p138 = scmp.eq.s32.totalorder %s28, 0
      %p139 = por %p137, %p138
      %s140 = ssub.s32 %s29, %s41
      %s141 = ssub.s32 %s30, %s37
      %s142 = sor.u32 %s140, %s141
      %p143 = scmp.eq.s32.totalorder %s142, 0
      %s145 = sadd.s32 %s144, 1
      %s146 = scalar_select %p143, %s144, %s145
      %p149 = pneg %p143
      %p150 = scmp.eq.s32.totalorder %s22, 1
      %p151 = por %p149, %p150
      %p152 = scmp.ne.s32.totalorder %s144, %s147
      %p153 = scmp.eq.s32.totalorder %s22, 0
      %p154 = por %p152, %p153
      %p155 = scmp.ne.s32.totalorder %s144, %s147
      %p156 = scmp.eq.s32.totalorder %s27, 1
      %p157 = por %p155, %p156
      %p158 = scmp.ne.s32.totalorder %s147, %s148
      %p159 = scmp.eq.s32.totalorder %s27, 0
      %p160 = por %p158, %p159
      %p161 = scmp.ne.s32.totalorder %s147, %s148
      %p162 = scmp.eq.s32.totalorder %s28, 1
      %p163 = por %p161, %p162
      %p165 = scmp.ne.s32.totalorder %s148, %s164
      %p166 = scmp.eq.s32.totalorder %s28, 0
      %p167 = por %p165, %p166
      %s168 = ssub.s32 %s29, %s41
      %s169 = ssub.s32 %s30, %s37
      %s170 = sor.u32 %s168, %s169
      %p171 = scmp.eq.s32.totalorder %s170, 0
      %s173 = sadd.s32 %s172, 1
      %s174 = scalar_select %p171, %s172, %s173
      %p177 = pneg %p171
      %p178 = scmp.eq.s32.totalorder %s22, 1
      %p179 = por %p177, %p178
      %p180 = scmp.ne.s32.totalorder %s172, %s175
      %p181 = scmp.eq.s32.totalorder %s22, 0
      %p182 = por %p180, %p181
      %p183 = scmp.ne.s32.totalorder %s172, %s175
      %p184 = scmp.eq.s32.totalorder %s27, 1
      %p185 = por %p183, %p184
      %p186 = scmp.ne.s32.totalorder %s175, %s176
      %p187 = scmp.eq.s32.totalorder %s27, 0
      %p188 = por %p186, %p187
      %p189 = scmp.ne.s32.totalorder %s175, %s176
      %p190 = scmp.eq.s32.totalorder %s28, 1
      %p191 = por %p189, %p190
      %p193 = scmp.ne.s32.totalorder %s176, %s192
      %p194 = scmp.eq.s32.totalorder %s28, 0
      %p195 = por %p193, %p194
      %p196 = scmp.le.s32.totalorder 1, %s22
      %p197 = scmp.lt.s32.totalorder %s22, 3
      %p198 = pnand %p196, %p197
      %p199 = pneg %p198
      // Predicated region
      $region9: #{tpu_custom_call.1} parent=5 // pred_check
        _
      $region10: #{tpu_custom_call.1} parent=5 // pred_check_branch
        %201 = sbr.rel (%p198) target = $region12
      $region11: #{tpu_custom_call.1} parent=5 // pred_region
        %s202 = ssub.s32 %s22, 1
        // Predicated region
        $region13: #{tpu_custom_call.1} parent=11 // pred_check
          %p203 = pneg %p83
        $region14: #{tpu_custom_call.1} parent=11 // pred_check_branch
          %205 = sbr.rel (%p203) target = $region16
        $region15: #{tpu_custom_call.1} parent=11 // pred_region
          %s207 = ssub.s32 768, 768
          %208 = vsyncadd [#allocation6], %s207
          %s209 = sshll.u32 [#allocation5], 4
          %s210 = int_to_ptr.vmem [resolvable:$true] %s209
          %215 = dma.hbm_to_vmem [thread:$0]  %s1, 768, %s210, [#allocation6], 192, 192, 12
        $region16: #{tpu_custom_call.1} parent=11 // pred_fallthru
          _
        // Predicated region
        $region17: #{tpu_custom_call.1} parent=11 // pred_check
          %p216 = pneg %p104
        $region18: #{tpu_custom_call.1} parent=11 // pred_check_branch
          %218 = sbr.rel (%p216) target = $region20
        $region19: #{tpu_custom_call.1} parent=11 // pred_region
          _
        $region20: #{tpu_custom_call.1} parent=11 // pred_fallthru
          _
      $region12: #{tpu_custom_call.1} parent=5 // pred_fallthru
        _
      %p219 = scmp.lt.s32.totalorder %s22, 2
      // Predicated region
      $region21: #{tpu_custom_call.1} parent=5 // pred_check
        %p220 = pneg %p219
      $region22: #{tpu_custom_call.1} parent=5 // pred_check_branch
        %222 = sbr.rel (%p220) target = $region24
      $region23: #{tpu_custom_call.1} parent=5 // pred_region
        // Predicated region
        $region25: #{tpu_custom_call.1} parent=23 // pred_check
          %p223 = pneg %p56
        $region26: #{tpu_custom_call.1} parent=23 // pred_check_branch
          %225 = sbr.rel (%p223) target = $region28
        $region27: #{tpu_custom_call.1} parent=23 // pred_region
          %s226 = sand.u32 %s46, 1
          %s227 = scalar_lea.sflag [#allocation3], %s226
          %s228 = sand.u32 %s46, 1
          %s229 = smul.addr %s228, 4
          %s230 = scalar_lea.vmem [#allocation2], %s229
          %s232 = ssub.s32 64, 64
          %233 = vsyncadd %s227, %s232
          %s234 = sadd.s32 %s30, %s29
          %s235 = smul.addr %s234, 64
          %s236 = scalar_lea.hbm %s0, %s235
          %s238 = sshll.u32 %s230, 4
          %s239 = int_to_ptr.vmem [resolvable:$true] %s238
          %241 = dma.hbm_to_vmem [thread:$0]  %s236, 64, %s239, %s227
        $region28: #{tpu_custom_call.1} parent=23 // pred_fallthru
          _
      $region24: #{tpu_custom_call.1} parent=5 // pred_fallthru
        _
      %p242 = scmp.le.s32.totalorder 1, %s22
      %p243 = scmp.lt.s32.totalorder %s22, 3
      %p244 = pnand %p242, %p243
      %p245 = pneg %p244
      // Predicated region
      $region29: #{tpu_custom_call.1} parent=5 // pred_check
        _
      $region30: #{tpu_custom_call.1} parent=5 // pred_check_branch
        %247 = sbr.rel (%p244) target = $region32
      $region31: #{tpu_custom_call.1} parent=5 // pred_region
        %s248 = ssub.s32 %s22, 1
        %s249 = sand.u32 %s49, 1
        %s250 = scalar_lea.sflag [#allocation3], %s249
        %s251 = sand.u32 %s49, 1
        %s252 = smul.addr %s251, 4
        %s253 = scalar_lea.vmem [#allocation2], %s252
        // Predicated region
        $region33: #{tpu_custom_call.1} parent=31 // pred_check
          %p254 = pneg %p62
        $region34: #{tpu_custom_call.1} parent=31 // pred_check_branch
          %256 = sbr.rel (%p254) target = $region36
        $region35: #{tpu_custom_call.1} parent=31 // pred_region
          %257 = dma.done %s250, 64
        $region36: #{tpu_custom_call.1} parent=31 // pred_fallthru
          _
        // Predicated region
        $region37: #{tpu_custom_call.1} parent=31 // pred_check
          %p258 = pneg %p83
        $region38: #{tpu_custom_call.1} parent=31 // pred_check_branch
          %260 = sbr.rel (%p258) target = $region40
        $region39: #{tpu_custom_call.1} parent=31 // pred_region
          %261 = dma.done [#allocation6], 768
        $region40: #{tpu_custom_call.1} parent=31 // pred_fallthru
          _
        %s262 = sand.u32 %s49, 1
        %s263 = scalar_lea.sflag [#allocation3], %s262
        %s264 = sand.u32 %s49, 1
        %s265 = smul.addr %s264, 4
        %s266 = scalar_lea.vmem [#allocation2], %s265
        %p267 = pneg %p62
        %p268 = pneg %p59
        %p269 = pneg %p83
        %p270 = pneg %p80
        %p271 = pneg %p104
        %p272 = pneg %p101
        %p273 = pneg %p132
        %p274 = pneg %p129
        %s275 = sand.u32 %s119, 1
        %s276 = scalar_lea.sflag [#allocation4], %s275
        %s277 = sand.u32 %s119, 1
        %s278 = smul.addr %s277, 4
        %s279 = scalar_lea.vmem [#allocation7], %s278
        %p280 = pneg %p160
        %p281 = pneg %p157
        %s282 = sand.u32 %s27, 1
        %s283 = scalar_lea.sflag [#allocation9], %s282
        %s284 = sand.u32 %s147, 1
        %s285 = smul.addr %s284, 4
        %s286 = scalar_lea.vmem [#allocation8], %s285
        %p287 = pneg %p188
        %p288 = pneg %p185
        %s289 = sand.u32 %s27, 1
        %s290 = scalar_lea.sflag [#allocation9], %s289
        %s291 = sand.u32 %s175, 1
        %s292 = smul.addr %s291, 4
        %s293 = scalar_lea.vmem [#allocation10], %s292
        %v295 = vld [vmem:[%s253] sm:$0xf]
        %v296 = vld [vmem:[#allocation5] sm:$0xff]
        %v297 = vld [vmem:[#allocation5 + $0x8] sm:$0xf]
        %v298 = vld [vmem:[#allocation5 + $0xc] sm:$0xff]
        %v299 = vld [vmem:[#allocation5 + $0x14] sm:$0xf]
        %v300 = vld [vmem:[#allocation5 + $0x18] sm:$0xff]
        %v301 = vld [vmem:[#allocation5 + $0x20] sm:$0xf]
        %v302 = vld [vmem:[#allocation5 + $0x24] sm:$0xff]
        %v303 = vld [vmem:[#allocation5 + $0x2c] sm:$0xf]
        %v304 = vld [vmem:[%s2] sm:$0x7]
        %v306 = vlaneseq
        %v307 = vshrl.u32 %v306, 7
        %v308 = vsub.s32 0, %v307
        %v309 = vrot.slane %v304, %v308
        %v310 = vlaneseq
        %v311 = vshrl.u32 %v310, 7
        %v312 = vsub.s32 1, %v311
        %v313 = vrot.slane %v304, %v312
        %v314 = vlaneseq
        %v315 = vshrl.u32 %v314, 7
        %v316 = vsub.s32 2, %v315
        %v317 = vrot.slane %v304, %v316
        %v329 = vunpack.c.l.b16 %v296
        %v330 = vunpack.c.h.b16 %v296
        %v331 = vunpack.c.l.b16 %v297
        %v332 = vunpack.c.l.b16 %v298
        %v333 = vunpack.c.h.b16 %v298
        %v334 = vunpack.c.l.b16 %v299
        %v335 = vunpack.c.l.b16 %v300
        %v336 = vunpack.c.h.b16 %v300
        %v337 = vunpack.c.l.b16 %v301
        %v338 = vunpack.c.l.b16 %v302
        %v339 = vunpack.c.h.b16 %v302
        %v340 = vunpack.c.l.b16 %v303
        %v341 = vpack.c.b16 %v332, %v329
        %v342 = vpack.c.b16 %v333, %v330
        %v343 = vpack.c.b16 %v334, %v331
        %v344 = vpack.c.b16 %v338, %v335
        %v345 = vpack.c.b16 %v339, %v336
        %v346 = vpack.c.b16 %v340, %v337
        %vm353 = vcmask 261120
        %v355 = vsel %vm353, %v295, 0
        %357 = vmatprep.subr.bf16.mxu0 %v342
        %358 = vmatpush1.bf16.msra.mxu0 %v341
        %359 = vmatprep.subr.bf16.mxu0 %v345
        %360 = vmatpush1.bf16.msra.mxu0 %v344
        %361 = vmatprep.subr.bf16.mxu0 0
        %362 = vmatpush1.bf16.msra.mxu0 0
        %363 = vmatprep.subr.bf16.mxu0 0
        %364 = vmatpush1.bf16.msra.mxu0 0
        %365 = vmatprep.subr.bf16.mxu0 0
        %366 = vmatpush1.bf16.msra.mxu0 0
        %367 = vmatprep.subr.bf16.mxu0 0
        %368 = vmatpush1.bf16.msra.mxu0 0
        %369 = vmatprep.subr.bf16.mxu0 0
        %370 = vmatpush1.bf16.msra.mxu0 0
        %371 = vmatprep.subr.bf16.mxu0 0
        %372 = vmatpush1.bf16.msra.mxu0 0
        %373 = vmatprep.subr.bf16.mxu0 0
        %374 = vmatpush1.bf16.msra.mxu0 0
        %375 = vmatprep.subr.bf16.mxu0 0
        %376 = vmatpush1.bf16.msra.mxu0 0
        %377 = vmatprep.subr.bf16.mxu0 0
        %378 = vmatpush1.bf16.msra.mxu0 0
        %379 = vmatprep.subr.bf16.mxu0 0
        %380 = vmatpush1.bf16.msra.mxu0 0
        %381 = vmatprep.subr.bf16.mxu0 0
        %382 = vmatpush1.bf16.msra.mxu0 0
        %383 = vmatprep.subr.bf16.mxu0 0
        %384 = vmatpush1.bf16.msra.mxu0 0
        %385 = vmatprep.subr.bf16.mxu0 0
        %386 = vmatpush1.bf16.msra.mxu0 0
        %387 = vmatprep.subr.bf16.mxu0 0
        %388 = vmatpush1.bf16.msra.mxu0 0
        %389 = vmatprep.mubr.bf16.mxu0 0
        %390 = vmatmul.mubr.bf16.gmra.mrb[0].mxu0 %v355
        %v391 = vpop.f32.mrb[0].mxu0
        %v392 = vadd.f32 %v309, %v391
        %v393 = vpop.f32.mrb[0].mxu0
        %v394 = vadd.f32 %v313, %v393
        %v395 = vpop.f32.mrb[0].mxu0
        %v396 = vpop.f32.mrb[0].mxu0
        %397 = vdwg.mxu0
        %398 = vmatprep.subr.bf16.mxu0 0
        %399 = vmatpush1.bf16.msra.mxu0 %v343
        %400 = vmatprep.subr.bf16.mxu0 0
        %401 = vmatpush1.bf16.msra.mxu0 %v346
        %402 = vmatprep.subr.bf16.mxu0 0
        %403 = vmatpush1.bf16.msra.mxu0 0
        %404 = vmatprep.subr.bf16.mxu0 0
        %405 = vmatpush1.bf16.msra.mxu0 0
        %406 = vmatprep.subr.bf16.mxu0 0
        %407 = vmatpush1.bf16.msra.mxu0 0
        %408 = vmatprep.subr.bf16.mxu0 0
        %409 = vmatpush1.bf16.msra.mxu0 0
        %410 = vmatprep.subr.bf16.mxu0 0
        %411 = vmatpush1.bf16.msra.mxu0 0
        %412 = vmatprep.subr.bf16.mxu0 0
        %413 = vmatpush1.bf16.msra.mxu0 0
        %414 = vmatprep.subr.bf16.mxu0 0
        %415 = vmatpush1.bf16.msra.mxu0 0
        %416 = vmatprep.subr.bf16.mxu0 0
        %417 = vmatpush1.bf16.msra.mxu0 0
        %418 = vmatprep.subr.bf16.mxu0 0
        %419 = vmatpush1.bf16.msra.mxu0 0
        %420 = vmatprep.subr.bf16.mxu0 0
        %421 = vmatpush1.bf16.msra.mxu0 0
        %422 = vmatprep.subr.bf16.mxu0 0
        %423 = vmatpush1.bf16.msra.mxu0 0
        %424 = vmatprep.subr.bf16.mxu0 0
        %425 = vmatpush1.bf16.msra.mxu0 0
        %426 = vmatprep.subr.bf16.mxu0 0
        %427 = vmatpush1.bf16.msra.mxu0 0
        %428 = vmatprep.subr.bf16.mxu0 0
        %429 = vmatpush1.bf16.msra.mxu0 0
        %430 = vmatprep.mubr.bf16.mxu0 0
        %431 = vmatmul.mubr.bf16.gmra.mrb[0].mxu0 %v355
        %v432 = vpop.f32.mrb[0].mxu0
        %v433 = vadd.f32 %v317, %v432
        %v434 = vpop.f32.mrb[0].mxu0
        %v435 = vpop.f32.mrb[0].mxu0
        %v436 = vpop.f32.mrb[0].mxu0
        %437 = vdwg.mxu0
        %v438 = vmul.f32 %v392, 0.25
        %v439 = vpack.c.bf16 %v438, %v438
        %440 = vst [vmem:[%s279] sm:$0xf] %v439
        %v441 = vpack.c.bf16 %v394, %v394
        %442 = vst [vmem:[%s286] sm:$0xf] %v441
        %v443 = vpack.c.bf16 %v433, %v433
        %444 = vst [vmem:[%s293] sm:$0xf] %v443
        %s445 = sand.u32 %s119, 1
        %s446 = scalar_lea.sflag [#allocation4], %s445
        %s447 = sand.u32 %s119, 1
        %s448 = smul.addr %s447, 4
        %s449 = scalar_lea.vmem [#allocation7], %s448
        %s450 = sand.u32 %s27, 1
        %s451 = scalar_lea.sflag [#allocation9], %s450
        %s452 = sand.u32 %s147, 1
        %s453 = smul.addr %s452, 4
        %s454 = scalar_lea.vmem [#allocation8], %s453
        %s455 = sand.u32 %s27, 1
        %s456 = scalar_lea.sflag [#allocation9], %s455
        %s457 = sand.u32 %s175, 1
        %s458 = smul.addr %s457, 4
        %s459 = scalar_lea.vmem [#allocation10], %s458
        // Predicated region
        $region41: #{tpu_custom_call.1} parent=31 // pred_check
          %p460 = pneg %p129
        $region42: #{tpu_custom_call.1} parent=31 // pred_check_branch
          %462 = sbr.rel (%p460) target = $region44
        $region43: #{tpu_custom_call.1} parent=31 // pred_region
          %s464 = ssub.s32 64, 64
          %465 = vsyncadd %s446, %s464
          %s466 = sadd.s32 %s32, %s31
          %s467 = smul.addr %s466, 64
          %s468 = scalar_lea.hbm %s3, %s467
          %s470 = sshll.u32 %s449, 4
          %s471 = int_to_ptr.vmem [resolvable:$true] %s470
          %473 = dma.vmem_to_hbm [thread:$0]  %s471, 64, %s468, %s446
        $region44: #{tpu_custom_call.1} parent=31 // pred_fallthru
          _
        // Predicated region
        $region45: #{tpu_custom_call.1} parent=31 // pred_check
          %p474 = pneg %p157
        $region46: #{tpu_custom_call.1} parent=31 // pred_check_branch
          %476 = sbr.rel (%p474) target = $region48
        $region47: #{tpu_custom_call.1} parent=31 // pred_region
          %s478 = ssub.s32 64, 64
          %479 = vsyncadd %s451, %s478
          %s480 = sadd.s32 %s32, %s31
          %s481 = smul.addr %s480, 64
          %s482 = scalar_lea.hbm %s4, %s481
          %s484 = sshll.u32 %s454, 4
          %s485 = int_to_ptr.vmem [resolvable:$true] %s484
          %487 = dma.vmem_to_hbm [thread:$0]  %s485, 64, %s482, %s451
        $region48: #{tpu_custom_call.1} parent=31 // pred_fallthru
          _
        // Predicated region
        $region49: #{tpu_custom_call.1} parent=31 // pred_check
          %p488 = pneg %p185
        $region50: #{tpu_custom_call.1} parent=31 // pred_check_branch
          %490 = sbr.rel (%p488) target = $region52
        $region51: #{tpu_custom_call.1} parent=31 // pred_region
          %s492 = ssub.s32 64, 64
          %493 = vsyncadd %s456, %s492
          %s494 = sadd.s32 %s32, %s31
          %s495 = smul.addr %s494, 64
          %s496 = scalar_lea.hbm %s5, %s495
          %s498 = sshll.u32 %s459, 4
          %s499 = int_to_ptr.vmem [resolvable:$true] %s498
          %501 = dma.vmem_to_hbm [thread:$0]  %s499, 64, %s496, %s456
        $region52: #{tpu_custom_call.1} parent=31 // pred_fallthru
          _
      $region32: #{tpu_custom_call.1} parent=5 // pred_fallthru
        _
      %p502 = scmp.le.s32.totalorder 2, %s22
      // Predicated region
      $region53: #{tpu_custom_call.1} parent=5 // pred_check
        %p503 = pneg %p502
      $region54: #{tpu_custom_call.1} parent=5 // pred_check_branch
        %505 = sbr.rel (%p503) target = $region56
      $region55: #{tpu_custom_call.1} parent=5 // pred_region
        %s506 = ssub.s32 %s22, 2
        // Predicated region
        $region57: #{tpu_custom_call.1} parent=55 // pred_check
          %p507 = pneg %p135
        $region58: #{tpu_custom_call.1} parent=55 // pred_check_branch
          %509 = sbr.rel (%p507) target = $region60
        $region59: #{tpu_custom_call.1} parent=55 // pred_region
          %s510 = sand.u32 %s120, 1
          %s511 = scalar_lea.sflag [#allocation4], %s510
          %s512 = sand.u32 %s120, 1
          %s513 = smul.addr %s512, 4
          %s514 = scalar_lea.vmem [#allocation7], %s513
          %515 = dma.done %s511, 64
        $region60: #{tpu_custom_call.1} parent=55 // pred_fallthru
          _
        // Predicated region
        $region61: #{tpu_custom_call.1} parent=55 // pred_check
          %p516 = pneg %p163
        $region62: #{tpu_custom_call.1} parent=55 // pred_check_branch
          %518 = sbr.rel (%p516) target = $region64
        $region63: #{tpu_custom_call.1} parent=55 // pred_region
          %s519 = sand.u32 %s28, 1
          %s520 = scalar_lea.sflag [#allocation9], %s519
          %s521 = sand.u32 %s148, 1
          %s522 = smul.addr %s521, 4
          %s523 = scalar_lea.vmem [#allocation8], %s522
          %524 = dma.done %s520, 64
        $region64: #{tpu_custom_call.1} parent=55 // pred_fallthru
          _
        // Predicated region
        $region65: #{tpu_custom_call.1} parent=55 // pred_check
          %p525 = pneg %p191
        $region66: #{tpu_custom_call.1} parent=55 // pred_check_branch
          %527 = sbr.rel (%p525) target = $region68
        $region67: #{tpu_custom_call.1} parent=55 // pred_region
          %s528 = sand.u32 %s28, 1
          %s529 = scalar_lea.sflag [#allocation9], %s528
          %s530 = sand.u32 %s176, 1
          %s531 = smul.addr %s530, 4
          %s532 = scalar_lea.vmem [#allocation10], %s531
          %533 = dma.done %s529, 64
        $region68: #{tpu_custom_call.1} parent=55 // pred_fallthru
          _
      $region56: #{tpu_custom_call.1} parent=5 // pred_fallthru
        _
    $region6: #{tpu_custom_call.1} parent=1 // loop_footer
      %s26 = sadd.s32 1, %s22
    $region7: #{tpu_custom_call.1} parent=1 // loop_footer_branch
      %21 = sbr.rel target = $region3
    $region8: #{tpu_custom_call.1} parent=1 // loop_exit
      _
    %534 = vsyncpa [#allocation3], 1
    %s535 = scalar_lea.sflag [#allocation3], 1
    %536 = vsyncpa %s535, 1
    %537 = vsyncpa [#allocation6], 1
    %538 = vsyncpa [#allocation4], 1
    %s539 = scalar_lea.sflag [#allocation4], 1
    %540 = vsyncpa %s539, 1
    %541 = vsyncpa [#allocation9], 1
    %s542 = scalar_lea.sflag [#allocation9], 1
    %543 = vsyncpa %s542, 1

</llo_original>
